<compile_context>
chip_gen: v5e
topology: v5e:2x2
jax: 0.10.0
libtpu: 0.0.40
codegen_flags: <defaults>
</compile_context>

<pallas_src>
import jax
import jax.numpy as jnp
from jax.experimental import pallas as pl
from jax.experimental.pallas import tpu as pltpu


# ----------------------------------------------------------------------------
# Kernel
# ----------------------------------------------------------------------------
def _sa_kernel(x_ref, t_ref, o_ref):
    # x_ref: (N, C, HW)   NCHW-native, H*W packed on the lane axis
    # t_ref: (2*HW, HW)   full 2-D conv Toeplitz matrix (built in wrapper)
    # o_ref: (N, C, HW)
    n_batch = x_ref.shape[0]
    t = t_ref[...]                                       # hoisted, read once

    for n in range(n_batch):                             # static, tiny (N=2)
        xn = x_ref[n]                                    # (C, HW)

        # Channel reductions (sublane axis) -> one row per plane.
        mean_r = jnp.mean(xn, axis=0, keepdims=True)     # (1, HW)
        max_r = jnp.max(xn, axis=0, keepdims=True)       # (1, HW)
        pc = jnp.concatenate([mean_r, max_r], axis=1)    # (1, 2*HW)

        # 3x3 / 2-plane conv (incl. zero padding and ky combine) as ONE
        # MXU matmul against the precomputed Toeplitz weight matrix.
        att = jax.nn.sigmoid(
            jnp.dot(pc, t, preferred_element_type=jnp.float32))   # (1, HW)

        # out = x * (1 + att): att broadcast over the C sublanes.
        o_ref[n] = xn * (1.0 + att)


# ----------------------------------------------------------------------------
# Wrapper-side (weight-only) Toeplitz builder
# ----------------------------------------------------------------------------
def _conv_toeplitz_2d(w, height, width):
    # w: (2, 3, 3) conv weight (output channel squeezed).
    # Returns T (2*HW, HW) with
    #   T[c*HW + (hi*W+wi), ho*W+wo] = w[c, hi-ho+1, wi-wo+1]
    #     if |hi-ho| <= 1 and |wi-wo| <= 1, else 0
    # so that for pc = [mean_plane | max_plane] (1, 2*HW), pc @ T is the full
    # padded 3x3 conv output (1, HW).  Pure weight rearrangement -- no
    # activations are touched here.
    hw = height * width
    idx = jnp.arange(hw)
    hi = (idx // width)[:, None]
    wi = (idx % width)[:, None]
    ho = (idx // width)[None, :]
    wo = (idx % width)[None, :]
    dy = hi - ho
    dx = wi - wo
    valid = (jnp.abs(dy) <= 1) & (jnp.abs(dx) <= 1)
    ky = jnp.clip(dy + 1, 0, 2)
    kx = jnp.clip(dx + 1, 0, 2)
    blocks = [jnp.where(valid, w[c][ky, kx], 0.0) for c in range(2)]
    return jnp.concatenate(blocks, axis=0).astype(jnp.float32)    # (2*HW, HW)


# ----------------------------------------------------------------------------
# Public entry point (NCHW in, NCHW out -- no transposes anywhere)
# ----------------------------------------------------------------------------
def sa_forward(x_nchw, conv_weight):
    # x_nchw: (N, C, H, W) float32; conv_weight: (1, 2, 3, 3) as nn.Conv2d(2,1,3).
    N, C, H, W = x_nchw.shape
    HW = H * W
    # Lane/sublane alignment assumed by this fast path.
    assert HW % 128 == 0 and C % 8 == 0, (
        "sa_forward fast path needs H*W % 128 == 0 and C % 8 == 0")

    tmat = _conv_toeplitz_2d(conv_weight[0], H, W)       # (2*HW, HW)
    x2 = x_nchw.reshape(N, C, HW)                        # free NCHW-native view

    out2 = pl.pallas_call(
        _sa_kernel,
        out_shape=jax.ShapeDtypeStruct((N, C, HW), jnp.float32),
        grid_spec=pltpu.PrefetchScalarGridSpec(
            num_scalar_prefetch=0,
            grid=(1,),
            in_specs=[
                pl.BlockSpec((N, C, HW), lambda i: (0, 0, 0)),
                pl.BlockSpec((2 * HW, HW), lambda i: (0, 0)),
            ],
            out_specs=pl.BlockSpec((N, C, HW), lambda i: (0, 0, 0)),
        ),
        compiler_params=pltpu.CompilerParams(
            dimension_semantics=("arbitrary",)),
    )(x2, tmat)
    return out2.reshape(N, C, H, W)


# ----------------------------------------------------------------------------
# Pure-JAX reference (mirrors the PyTorch module op-for-op)
# ----------------------------------------------------------------------------
def sa_reference(x_nchw, conv_weight):
    mean_c = jnp.mean(x_nchw, axis=1, keepdims=True)
    max_c = jnp.max(x_nchw, axis=1, keepdims=True)
    f = jnp.concatenate([mean_c, max_c], axis=1)                 # (N,2,H,W)
    att = jax.lax.conv_general_dilated(
        f, conv_weight, window_strides=(1, 1),
        padding=((1, 1), (1, 1)),
        dimension_numbers=("NCHW", "OIHW", "NCHW"),
        precision=jax.lax.Precision.HIGHEST)
    att = jax.nn.sigmoid(att)
    return x_nchw + x_nchw * att


if __name__ == "__main__":
    key = jax.random.PRNGKey(0)
    kx, kw = jax.random.split(key)
    N, C, H, W = 2, 64, 16, 16
    x = jax.random.normal(kx, (N, C, H, W), jnp.float32)
    conv_w = 0.2 * jax.random.normal(kw, (1, 2, 3, 3), jnp.float32)

    out = jax.jit(sa_forward)(x, conv_w)
    jax.block_until_ready(out)
    assert out.shape == (N, C, H, W)

    # Correctness check against a plain-JAX reference (tolerance absorbs MXU
    # rounding of the in-kernel f32 Toeplitz matmul; structural errors would
    # be O(0.1..1)).
    ref = jax.jit(sa_reference)(x, conv_w)
    jax.block_until_ready(ref)
    max_err = float(jnp.max(jnp.abs(out - ref)))
    assert max_err < 2e-2, f"kernel/reference mismatch: max abs err {max_err}"

    print("KERNEL_OK")
</pallas_src>

<mosaic_0001>
module attributes {stable_mosaic.version = 11 : i64} {
  func.func @_sa_kernel(%arg0: i32, %arg1: memref<2x64x256xf32, #tpu.memory_space<vmem>>, %arg2: memref<512x256xf32, #tpu.memory_space<vmem>>, %arg3: memref<2x64x256xf32, #tpu.memory_space<vmem>>) attributes {dimension_semantics = [#tpu.dimension_semantics<arbitrary>], iteration_bounds = array<i64: 1>, scalar_prefetch = 0 : i64, scratch_operands = 0 : i64, tpu.core_type = #tpu.core_type<tc>, window_params = [{pipeline_mode = #tpu.pipeline_mode<synchronous>, transform_indices = @transform_0, window_bounds = array<i64: 2, 64, 256>}, {pipeline_mode = #tpu.pipeline_mode<synchronous>, transform_indices = @transform_1, window_bounds = array<i64: 512, 256>}, {pipeline_mode = #tpu.pipeline_mode<synchronous>, transform_indices = @transform_2, window_bounds = array<i64: 2, 64, 256>}]} {
    %c0 = arith.constant 0 : index
    %c0_0 = arith.constant 0 : index
    %0 = vector.load %arg2[%c0, %c0_0] : memref<512x256xf32, #tpu.memory_space<vmem>>, vector<512x256xf32>
    %c0_1 = arith.constant 0 : index
    %c0_2 = arith.constant 0 : index
    %c0_3 = arith.constant 0 : index
    %1 = vector.load %arg1[%c0_1, %c0_2, %c0_3] : memref<2x64x256xf32, #tpu.memory_space<vmem>>, vector<1x64x256xf32>
    %2 = vector.shape_cast %1 : vector<1x64x256xf32> to vector<64x256xf32>
    %cst = arith.constant dense<0.000000e+00> : vector<256xf32>
    %3 = vector.multi_reduction <add>, %2, %cst [0] : vector<64x256xf32> to vector<256xf32>
    %4 = vector.shape_cast %3 : vector<256xf32> to vector<1x256xf32>
    %cst_4 = arith.constant 6.400000e+01 : f32
    %5 = vector.broadcast %cst_4 : f32 to vector<1x256xf32>
    %6 = arith.divf %4, %5 : vector<1x256xf32>
    %cst_5 = arith.constant dense<0xFF800000> : vector<256xf32>
    %7 = vector.multi_reduction <maximumf>, %2, %cst_5 [0] : vector<64x256xf32> to vector<256xf32>
    %8 = vector.shape_cast %7 : vector<256xf32> to vector<1x256xf32>
    %9 = tpu.concatenate %6, %8 in 1 : vector<1x256xf32>, vector<1x256xf32> -> vector<1x512xf32>
    %cst_6 = arith.constant dense<0.000000e+00> : vector<1x256xf32>
    %10 = tpu.matmul %9, %0, %cst_6 {dimension_numbers = #tpu.dot_dimension_numbers<[1], [0], [0], [1], [0, 0, 1, 1], [], []>} : vector<1x512xf32>, vector<512x256xf32>, vector<1x256xf32> -> vector<1x256xf32>
    %11 = arith.negf %10 : vector<1x256xf32>
    %12 = math.exp %11 : vector<1x256xf32>
    %cst_7 = arith.constant 1.000000e+00 : f32
    %13 = vector.broadcast %cst_7 : f32 to vector<1x256xf32>
    %14 = arith.addf %13, %12 : vector<1x256xf32>
    %15 = arith.divf %13, %14 : vector<1x256xf32>
    %cst_8 = arith.constant 1.000000e+00 : f32
    %16 = vector.broadcast %cst_8 : f32 to vector<1x256xf32>
    %17 = arith.addf %16, %15 : vector<1x256xf32>
    %18 = vector.broadcast %17 : vector<1x256xf32> to vector<64x256xf32>
    %19 = arith.mulf %2, %18 : vector<64x256xf32>
    %c0_9 = arith.constant 0 : index
    %c0_10 = arith.constant 0 : index
    %c0_11 = arith.constant 0 : index
    %20 = vector.load %arg3[%c0_9, %c0_10, %c0_11] : memref<2x64x256xf32, #tpu.memory_space<vmem>>, vector<1x64x256xf32>
    %21 = vector.shape_cast %20 : vector<1x64x256xf32> to vector<64x256xf32>
    %22 = vector.shape_cast %19 : vector<64x256xf32> to vector<1x64x256xf32>
    tpu.vector_store %arg3[%c0_9, %c0_10, %c0_11], %22 {strides = array<i32>} : memref<2x64x256xf32, #tpu.memory_space<vmem>>, vector<1x64x256xf32>,
    %c1 = arith.constant 1 : index
    %c0_12 = arith.constant 0 : index
    %c0_13 = arith.constant 0 : index
    %23 = vector.load %arg1[%c1, %c0_12, %c0_13] : memref<2x64x256xf32, #tpu.memory_space<vmem>>, vector<1x64x256xf32>
    %24 = vector.shape_cast %23 : vector<1x64x256xf32> to vector<64x256xf32>
    %cst_14 = arith.constant dense<0.000000e+00> : vector<256xf32>
    %25 = vector.multi_reduction <add>, %24, %cst_14 [0] : vector<64x256xf32> to vector<256xf32>
    %26 = vector.shape_cast %25 : vector<256xf32> to vector<1x256xf32>
    %cst_15 = arith.constant 6.400000e+01 : f32
    %27 = vector.broadcast %cst_15 : f32 to vector<1x256xf32>
    %28 = arith.divf %26, %27 : vector<1x256xf32>
    %cst_16 = arith.constant dense<0xFF800000> : vector<256xf32>
    %29 = vector.multi_reduction <maximumf>, %24, %cst_16 [0] : vector<64x256xf32> to vector<256xf32>
    %30 = vector.shape_cast %29 : vector<256xf32> to vector<1x256xf32>
    %31 = tpu.concatenate %28, %30 in 1 : vector<1x256xf32>, vector<1x256xf32> -> vector<1x512xf32>
    %cst_17 = arith.constant dense<0.000000e+00> : vector<1x256xf32>
    %32 = tpu.matmul %31, %0, %cst_17 {dimension_numbers = #tpu.dot_dimension_numbers<[1], [0], [0], [1], [0, 0, 1, 1], [], []>} : vector<1x512xf32>, vector<512x256xf32>, vector<1x256xf32> -> vector<1x256xf32>
    %33 = arith.negf %32 : vector<1x256xf32>
    %34 = math.exp %33 : vector<1x256xf32>
    %cst_18 = arith.constant 1.000000e+00 : f32
    %35 = vector.broadcast %cst_18 : f32 to vector<1x256xf32>
    %36 = arith.addf %35, %34 : vector<1x256xf32>
    %37 = arith.divf %35, %36 : vector<1x256xf32>
    %cst_19 = arith.constant 1.000000e+00 : f32
    %38 = vector.broadcast %cst_19 : f32 to vector<1x256xf32>
    %39 = arith.addf %38, %37 : vector<1x256xf32>
    %40 = vector.broadcast %39 : vector<1x256xf32> to vector<64x256xf32>
    %41 = arith.mulf %24, %40 : vector<64x256xf32>
    %c1_20 = arith.constant 1 : index
    %c0_21 = arith.constant 0 : index
    %c0_22 = arith.constant 0 : index
    %42 = vector.load %arg3[%c1_20, %c0_21, %c0_22] : memref<2x64x256xf32, #tpu.memory_space<vmem>>, vector<1x64x256xf32>
    %43 = vector.shape_cast %42 : vector<1x64x256xf32> to vector<64x256xf32>
    %44 = vector.shape_cast %41 : vector<64x256xf32> to vector<1x64x256xf32>
    tpu.vector_store %arg3[%c1_20, %c0_21, %c0_22], %44 {strides = array<i32>} : memref<2x64x256xf32, #tpu.memory_space<vmem>>, vector<1x64x256xf32>,
    return
  }
  func.func @transform_0(%arg0: i32) -> (i32, i32, i32) {
    %c0_i32 = arith.constant 0 : i32
    %c0_i32_0 = arith.constant 0 : i32
    %c0_i32_1 = arith.constant 0 : i32
    %c0_i32_2 = arith.constant 0 : i32
    return %c0_i32, %c0_i32_0, %c0_i32_1 : i32, i32, i32
  }
  func.func @transform_1(%arg0: i32) -> (i32, i32) {
    %c0_i32 = arith.constant 0 : i32
    %c0_i32_0 = arith.constant 0 : i32
    %c0_i32_1 = arith.constant 0 : i32
    return %c0_i32, %c0_i32_0 : i32, i32
  }
  func.func @transform_2(%arg0: i32) -> (i32, i32, i32) {
    %c0_i32 = arith.constant 0 : i32
    %c0_i32_0 = arith.constant 0 : i32
    %c0_i32_1 = arith.constant 0 : i32
    %c0_i32_2 = arith.constant 0 : i32
    return %c0_i32, %c0_i32_0, %c0_i32_1 : i32, i32, i32
  }
}

</mosaic_0001>

<llo_original>
// kernel: sa_forward.1
$region0: #{sa_forward.1}
  #allocation0 [shape = 'u32[]', space=smem, size = 0x4, offset = 0x4, fixed_abs, tag = 'smem constant byte address 0x4 - core index']
  #allocation1 [shape = 'u32[72,128]{1,0:T(1,128)}', space=vmem, size = 0x9000, scoped, tag = 'internal scratch']
  %s0 = inlined_call_operand.vmem [shape: f32[2,64,256], index: 0, kind: input, shape index: {}]
  %s1 = inlined_call_operand.vmem [shape: f32[512,256], index: 1, kind: input, shape index: {}]
  %s2 = inlined_call_operand.vmem [shape: f32[2,64,256], index: 2, kind: output, shape index: {}]
  %s3 = sld [smem:[#allocation0]]
  $region18: #{sa_forward.1} parent=0
    _
  %s5 = ssub.s32 1, %s3
  %s6 = scalar_select 0, %s5, %s3
  // Predicated region
  $region2: #{sa_forward.1} parent=0 // pred_check
    _
  $region3: #{sa_forward.1} parent=0 // pred_check_branch
    %8 = sbr.rel (0) target = $region5
  $region4: #{sa_forward.1} parent=0 // pred_region
    _
  $region5: #{sa_forward.1} parent=0 // pred_fallthru
    _
  // Predicated region
  $region6: #{sa_forward.1} parent=0 // pred_check
    _
  $region7: #{sa_forward.1} parent=0 // pred_check_branch
    %10 = sbr.rel (0) target = $region9
  $region8: #{sa_forward.1} parent=0 // pred_region
    _
  $region9: #{sa_forward.1} parent=0 // pred_fallthru
    _
  %v11 = vld [vmem:[%s1] sm:$0xff]
  %v12 = vld [vmem:[%s1 + $0x8] sm:$0xff]
  %v13 = vld [vmem:[%s1 + $0x10] sm:$0xff]
  %v14 = vld [vmem:[%s1 + $0x18] sm:$0xff]
  %v15 = vld [vmem:[%s1 + $0x20] sm:$0xff]
  %v16 = vld [vmem:[%s1 + $0x28] sm:$0xff]
  %v17 = vld [vmem:[%s1 + $0x30] sm:$0xff]
  %v18 = vld [vmem:[%s1 + $0x38] sm:$0xff]
  %v19 = vld [vmem:[%s1 + $0x40] sm:$0xff]
  %v20 = vld [vmem:[%s1 + $0x48] sm:$0xff]
  %v21 = vld [vmem:[%s1 + $0x50] sm:$0xff]
  %v22 = vld [vmem:[%s1 + $0x58] sm:$0xff]
  %v23 = vld [vmem:[%s1 + $0x60] sm:$0xff]
  %v24 = vld [vmem:[%s1 + $0x68] sm:$0xff]
  %v25 = vld [vmem:[%s1 + $0x70] sm:$0xff]
  %v26 = vld [vmem:[%s1 + $0x78] sm:$0xff]
  %v27 = vld [vmem:[%s1 + $0x80] sm:$0xff]
  %v28 = vld [vmem:[%s1 + $0x88] sm:$0xff]
  %v29 = vld [vmem:[%s1 + $0x90] sm:$0xff]
  %v30 = vld [vmem:[%s1 + $0x98] sm:$0xff]
  %v31 = vld [vmem:[%s1 + $0xa0] sm:$0xff]
  %v32 = vld [vmem:[%s1 + $0xa8] sm:$0xff]
  %v33 = vld [vmem:[%s1 + $0xb0] sm:$0xff]
  %v34 = vld [vmem:[%s1 + $0xb8] sm:$0xff]
  %v35 = vld [vmem:[%s1 + $0xc0] sm:$0xff]
  %v36 = vld [vmem:[%s1 + $0xc8] sm:$0xff]
  %v37 = vld [vmem:[%s1 + $0xd0] sm:$0xff]
  %v38 = vld [vmem:[%s1 + $0xd8] sm:$0xff]
  %v39 = vld [vmem:[%s1 + $0xe0] sm:$0xff]
  %v40 = vld [vmem:[%s1 + $0xe8] sm:$0xff]
  %v41 = vld [vmem:[%s1 + $0xf0] sm:$0xff]
  %v42 = vld [vmem:[%s1 + $0xf8] sm:$0xff]
  %v43 = vld [vmem:[%s1 + $0x100] sm:$0xff]
  %v44 = vld [vmem:[%s1 + $0x108] sm:$0xff]
  %v45 = vld [vmem:[%s1 + $0x110] sm:$0xff]
  %v46 = vld [vmem:[%s1 + $0x118] sm:$0xff]
  %v47 = vld [vmem:[%s1 + $0x120] sm:$0xff]
  %v48 = vld [vmem:[%s1 + $0x128] sm:$0xff]
  %v49 = vld [vmem:[%s1 + $0x130] sm:$0xff]
  %v50 = vld [vmem:[%s1 + $0x138] sm:$0xff]
  %v51 = vld [vmem:[%s1 + $0x140] sm:$0xff]
  %v52 = vld [vmem:[%s1 + $0x148] sm:$0xff]
  %v53 = vld [vmem:[%s1 + $0x150] sm:$0xff]
  %v54 = vld [vmem:[%s1 + $0x158] sm:$0xff]
  %v55 = vld [vmem:[%s1 + $0x160] sm:$0xff]
  %v56 = vld [vmem:[%s1 + $0x168] sm:$0xff]
  %v57 = vld [vmem:[%s1 + $0x170] sm:$0xff]
  %v58 = vld [vmem:[%s1 + $0x178] sm:$0xff]
  %v59 = vld [vmem:[%s1 + $0x180] sm:$0xff]
  %v60 = vld [vmem:[%s1 + $0x188] sm:$0xff]
  %v61 = vld [vmem:[%s1 + $0x190] sm:$0xff]
  %v62 = vld [vmem:[%s1 + $0x198] sm:$0xff]
  %v63 = vld [vmem:[%s1 + $0x1a0] sm:$0xff]
  %v64 = vld [vmem:[%s1 + $0x1a8] sm:$0xff]
  %v65 = vld [vmem:[%s1 + $0x1b0] sm:$0xff]
  %v66 = vld [vmem:[%s1 + $0x1b8] sm:$0xff]
  %v67 = vld [vmem:[%s1 + $0x1c0] sm:$0xff]
  %v68 = vld [vmem:[%s1 + $0x1c8] sm:$0xff]
  %v69 = vld [vmem:[%s1 + $0x1d0] sm:$0xff]
  %v70 = vld [vmem:[%s1 + $0x1d8] sm:$0xff]
  %v71 = vld [vmem:[%s1 + $0x1e0] sm:$0xff]
  %v72 = vld [vmem:[%s1 + $0x1e8] sm:$0xff]
  %v73 = vld [vmem:[%s1 + $0x1f0] sm:$0xff]
  %v74 = vld [vmem:[%s1 + $0x1f8] sm:$0xff]
  %v75 = vld [vmem:[%s1 + $0x200] sm:$0xff]
  %v76 = vld [vmem:[%s1 + $0x208] sm:$0xff]
  %v77 = vld [vmem:[%s1 + $0x210] sm:$0xff]
  %v78 = vld [vmem:[%s1 + $0x218] sm:$0xff]
  %v79 = vld [vmem:[%s1 + $0x220] sm:$0xff]
  %v80 = vld [vmem:[%s1 + $0x228] sm:$0xff]
  %v81 = vld [vmem:[%s1 + $0x230] sm:$0xff]
  %v82 = vld [vmem:[%s1 + $0x238] sm:$0xff]
  %v83 = vld [vmem:[%s1 + $0x240] sm:$0xff]
  %v84 = vld [vmem:[%s1 + $0x248] sm:$0xff]
  %v85 = vld [vmem:[%s1 + $0x250] sm:$0xff]
  %v86 = vld [vmem:[%s1 + $0x258] sm:$0xff]
  %v87 = vld [vmem:[%s1 + $0x260] sm:$0xff]
  %v88 = vld [vmem:[%s1 + $0x268] sm:$0xff]
  %v89 = vld [vmem:[%s1 + $0x270] sm:$0xff]
  %v90 = vld [vmem:[%s1 + $0x278] sm:$0xff]
  %v91 = vld [vmem:[%s1 + $0x280] sm:$0xff]
  %v92 = vld [vmem:[%s1 + $0x288] sm:$0xff]
  %v93 = vld [vmem:[%s1 + $0x290] sm:$0xff]
  %v94 = vld [vmem:[%s1 + $0x298] sm:$0xff]
  %v95 = vld [vmem:[%s1 + $0x2a0] sm:$0xff]
  %v96 = vld [vmem:[%s1 + $0x2a8] sm:$0xff]
  %v97 = vld [vmem:[%s1 + $0x2b0] sm:$0xff]
  %v98 = vld [vmem:[%s1 + $0x2b8] sm:$0xff]
  %v99 = vld [vmem:[%s1 + $0x2c0] sm:$0xff]
  %v100 = vld [vmem:[%s1 + $0x2c8] sm:$0xff]
  %v101 = vld [vmem:[%s1 + $0x2d0] sm:$0xff]
  %v102 = vld [vmem:[%s1 + $0x2d8] sm:$0xff]
  %v103 = vld [vmem:[%s1 + $0x2e0] sm:$0xff]
  %v104 = vld [vmem:[%s1 + $0x2e8] sm:$0xff]
  %v105 = vld [vmem:[%s1 + $0x2f0] sm:$0xff]
  %v106 = vld [vmem:[%s1 + $0x2f8] sm:$0xff]
  %v107 = vld [vmem:[%s1 + $0x300] sm:$0xff]
  %v108 = vld [vmem:[%s1 + $0x308] sm:$0xff]
  %v109 = vld [vmem:[%s1 + $0x310] sm:$0xff]
  %v110 = vld [vmem:[%s1 + $0x318] sm:$0xff]
  %v111 = vld [vmem:[%s1 + $0x320] sm:$0xff]
  %v112 = vld [vmem:[%s1 + $0x328] sm:$0xff]
  %v113 = vld [vmem:[%s1 + $0x330] sm:$0xff]
  %v114 = vld [vmem:[%s1 + $0x338] sm:$0xff]
  %v115 = vld [vmem:[%s1 + $0x340] sm:$0xff]
  %v116 = vld [vmem:[%s1 + $0x348] sm:$0xff]
  %v117 = vld [vmem:[%s1 + $0x350] sm:$0xff]
  %v118 = vld [vmem:[%s1 + $0x358] sm:$0xff]
  %v119 = vld [vmem:[%s1 + $0x360] sm:$0xff]
  %v120 = vld [vmem:[%s1 + $0x368] sm:$0xff]
  %v121 = vld [vmem:[%s1 + $0x370] sm:$0xff]
  %v122 = vld [vmem:[%s1 + $0x378] sm:$0xff]
  %v123 = vld [vmem:[%s1 + $0x380] sm:$0xff]
  %v124 = vld [vmem:[%s1 + $0x388] sm:$0xff]
  %v125 = vld [vmem:[%s1 + $0x390] sm:$0xff]
  %v126 = vld [vmem:[%s1 + $0x398] sm:$0xff]
  %v127 = vld [vmem:[%s1 + $0x3a0] sm:$0xff]
  %v128 = vld [vmem:[%s1 + $0x3a8] sm:$0xff]
  %v129 = vld [vmem:[%s1 + $0x3b0] sm:$0xff]
  %v130 = vld [vmem:[%s1 + $0x3b8] sm:$0xff]
  %v131 = vld [vmem:[%s1 + $0x3c0] sm:$0xff]
  %v132 = vld [vmem:[%s1 + $0x3c8] sm:$0xff]
  %v133 = vld [vmem:[%s1 + $0x3d0] sm:$0xff]
  %v134 = vld [vmem:[%s1 + $0x3d8] sm:$0xff]
  %v135 = vld [vmem:[%s1 + $0x3e0] sm:$0xff]
  %v136 = vld [vmem:[%s1 + $0x3e8] sm:$0xff]
  %v137 = vld [vmem:[%s1 + $0x3f0] sm:$0xff]
  %v138 = vld [vmem:[%s1 + $0x3f8] sm:$0xff]
  %v139 = vld [vmem:[%s0] sm:$0xff]
  %v140 = vld [vmem:[%s0 + $0x8] sm:$0xff]
  %v141 = vld [vmem:[%s0 + $0x10] sm:$0xff]
  %v142 = vld [vmem:[%s0 + $0x18] sm:$0xff]
  %v143 = vld [vmem:[%s0 + $0x20] sm:$0xff]
  %v144 = vld [vmem:[%s0 + $0x28] sm:$0xff]
  %v145 = vld [vmem:[%s0 + $0x30] sm:$0xff]
  %v146 = vld [vmem:[%s0 + $0x38] sm:$0xff]
  %v147 = vld [vmem:[%s0 + $0x40] sm:$0xff]
  %v148 = vld [vmem:[%s0 + $0x48] sm:$0xff]
  %v149 = vld [vmem:[%s0 + $0x50] sm:$0xff]
  %v150 = vld [vmem:[%s0 + $0x58] sm:$0xff]
  %v151 = vld [vmem:[%s0 + $0x60] sm:$0xff]
  %v152 = vld [vmem:[%s0 + $0x68] sm:$0xff]
  %v153 = vld [vmem:[%s0 + $0x70] sm:$0xff]
  %v154 = vld [vmem:[%s0 + $0x78] sm:$0xff]
  %v155 = vadd.f32 %v139, %v141
  %v156 = vadd.f32 %v155, %v143
  %v157 = vadd.f32 %v156, %v145
  %v158 = vadd.f32 %v157, %v147
  %v159 = vadd.f32 %v158, %v149
  %v160 = vadd.f32 %v159, %v151
  %v161 = vadd.f32 %v160, %v153
  %v162 = vrot.slane %v161, 4
  %v163 = vadd.f32 %v161, %v162
  %v164 = vrot.slane %v163, 2
  %v165 = vadd.f32 %v163, %v164
  %v166 = vrot.slane %v165, 1
  %v167 = vadd.f32 %v165, %v166
  %v168 = vadd.f32 %v140, %v142
  %v169 = vadd.f32 %v168, %v144
  %v170 = vadd.f32 %v169, %v146
  %v171 = vadd.f32 %v170, %v148
  %v172 = vadd.f32 %v171, %v150
  %v173 = vadd.f32 %v172, %v152
  %v174 = vadd.f32 %v173, %v154
  %v175 = vrot.slane %v174, 4
  %v176 = vadd.f32 %v174, %v175
  %v177 = vrot.slane %v176, 2
  %v178 = vadd.f32 %v176, %v177
  %v179 = vrot.slane %v178, 1
  %v180 = vadd.f32 %v178, %v179
  %v181 = vrcp.pop 64.0
  %v182 = vmul.f32 64.0, %v181
  %v183 = vsub.f32 1.0, %v182
  %v184 = vmul.f32 %v181, %v183
  %v185 = vadd.f32 %v181, %v184
  %vm186 = vweird.f32 %v181
  %v187 = vsel %vm186, %v181, %v185
  %v188 = vmul.f32 %v167, %v187
  %v189 = vmul.f32 %v180, %v187
  %v190 = vmax.f32 %v139, %v143
  %v191 = vmax.f32 %v141, %v145
  %v192 = vmax.f32 %v190, %v147
  %v193 = vmax.f32 %v191, %v149
  %v194 = vmax.f32 %v192, %v151
  %v195 = vmax.f32 %v193, %v153
  %v196 = vmax.f32 %v194, %v195
  %v197 = vrot.slane %v196, 4
  %v198 = vmax.f32 %v196, %v197
  %v199 = vrot.slane %v198, 2
  %v200 = vmax.f32 %v198, %v199
  %v201 = vrot.slane %v200, 1
  %v202 = vmax.f32 %v200, %v201
  %v203 = vmax.f32 %v140, %v144
  %v204 = vmax.f32 %v142, %v146
  %v205 = vmax.f32 %v203, %v148
  %v206 = vmax.f32 %v204, %v150
  %v207 = vmax.f32 %v205, %v152
  %v208 = vmax.f32 %v206, %v154
  %v209 = vmax.f32 %v207, %v208
  %v210 = vrot.slane %v209, 4
  %v211 = vmax.f32 %v209, %v210
  %v212 = vrot.slane %v211, 2
  %v213 = vmax.f32 %v211, %v212
  %v214 = vrot.slane %v213, 1
  %v215 = vmax.f32 %v213, %v214
  %216 = vmatpush.msra.mxu0 %v41
  %217 = vmatpush.msra.mxu0 %v39
  %218 = vmatpush.msra.mxu0 %v37
  %219 = vmatpush.msra.mxu0 %v35
  %220 = vmatpush.msra.mxu0 %v33
  %221 = vmatpush.msra.mxu0 %v31
  %222 = vmatpush.msra.mxu0 %v29
  %223 = vmatpush.msra.mxu0 %v27
  %224 = vmatpush.msra.mxu0 %v25
  %225 = vmatpush.msra.mxu0 %v23
  %226 = vmatpush.msra.mxu0 %v21
  %227 = vmatpush.msra.mxu0 %v19
  %228 = vmatpush.msra.mxu0 %v17
  %229 = vmatpush.msra.mxu0 %v15
  %230 = vmatpush.msra.mxu0 %v13
  %231 = vmatpush.msra.mxu0 %v11
  %232 = vmatmul.f32.gmra.mxu0 %v188
  %v233 = vpop.f32.mrf.mxu0
  %v234 = vadd.f32 0.0, %v233
  %235 = vdwg.mxu0
  %236 = vmatpush.msra.mxu0 %v73
  %237 = vmatpush.msra.mxu0 %v71
  %238 = vmatpush.msra.mxu0 %v69
  %239 = vmatpush.msra.mxu0 %v67
  %240 = vmatpush.msra.mxu0 %v65
  %241 = vmatpush.msra.mxu0 %v63
  %242 = vmatpush.msra.mxu0 %v61
  %243 = vmatpush.msra.mxu0 %v59
  %244 = vmatpush.msra.mxu0 %v57
  %245 = vmatpush.msra.mxu0 %v55
  %246 = vmatpush.msra.mxu0 %v53
  %247 = vmatpush.msra.mxu0 %v51
  %248 = vmatpush.msra.mxu0 %v49
  %249 = vmatpush.msra.mxu0 %v47
  %250 = vmatpush.msra.mxu0 %v45
  %251 = vmatpush.msra.mxu0 %v43
  %252 = vmatmul.f32.gmra.mxu0 %v189
  %v253 = vpop.f32.mrf.mxu0
  %v254 = vadd.f32 %v234, %v253
  %255 = vdwg.mxu0
  %256 = vmatpush.msra.mxu0 %v105
  %257 = vmatpush.msra.mxu0 %v103
  %258 = vmatpush.msra.mxu0 %v101
  %259 = vmatpush.msra.mxu0 %v99
  %260 = vmatpush.msra.mxu0 %v97
  %261 = vmatpush.msra.mxu0 %v95
  %262 = vmatpush.msra.mxu0 %v93
  %263 = vmatpush.msra.mxu0 %v91
  %264 = vmatpush.msra.mxu0 %v89
  %265 = vmatpush.msra.mxu0 %v87
  %266 = vmatpush.msra.mxu0 %v85
  %267 = vmatpush.msra.mxu0 %v83
  %268 = vmatpush.msra.mxu0 %v81
  %269 = vmatpush.msra.mxu0 %v79
  %270 = vmatpush.msra.mxu0 %v77
  %271 = vmatpush.msra.mxu0 %v75
  %272 = vmatmul.f32.gmra.mxu0 %v202
  %v273 = vpop.f32.mrf.mxu0
  %v274 = vadd.f32 %v254, %v273
  %275 = vdwg.mxu0
  %276 = vmatpush.msra.mxu0 %v137
  %277 = vmatpush.msra.mxu0 %v135
  %278 = vmatpush.msra.mxu0 %v133
  %279 = vmatpush.msra.mxu0 %v131
  %280 = vmatpush.msra.mxu0 %v129
  %281 = vmatpush.msra.mxu0 %v127
  %282 = vmatpush.msra.mxu0 %v125
  %283 = vmatpush.msra.mxu0 %v123
  %284 = vmatpush.msra.mxu0 %v121
  %285 = vmatpush.msra.mxu0 %v119
  %286 = vmatpush.msra.mxu0 %v117
  %287 = vmatpush.msra.mxu0 %v115
  %288 = vmatpush.msra.mxu0 %v113
  %289 = vmatpush.msra.mxu0 %v111
  %290 = vmatpush.msra.mxu0 %v109
  %291 = vmatpush.msra.mxu0 %v107
  %292 = vmatmul.f32.gmra.mxu0 %v215
  %v293 = vpop.f32.mrf.mxu0
  %v294 = vadd.f32 %v274, %v293
  %295 = vdwg.mxu0
  %296 = vmatpush.msra.mxu0 %v42
  %297 = vmatpush.msra.mxu0 %v40
  %298 = vmatpush.msra.mxu0 %v38
  %299 = vmatpush.msra.mxu0 %v36
  %300 = vmatpush.msra.mxu0 %v34
  %301 = vmatpush.msra.mxu0 %v32
  %302 = vmatpush.msra.mxu0 %v30
  %303 = vmatpush.msra.mxu0 %v28
  %304 = vmatpush.msra.mxu0 %v26
  %305 = vmatpush.msra.mxu0 %v24
  %306 = vmatpush.msra.mxu0 %v22
  %307 = vmatpush.msra.mxu0 %v20
  %308 = vmatpush.msra.mxu0 %v18
  %309 = vmatpush.msra.mxu0 %v16
  %310 = vmatpush.msra.mxu0 %v14
  %311 = vmatpush.msra.mxu0 %v12
  %312 = vmatmul.f32.gmra.mxu0 %v188
  %v313 = vpop.f32.mrf.mxu0
  %v314 = vadd.f32 0.0, %v313
  %315 = vdwg.mxu0
  %316 = vmatpush.msra.mxu0 %v74
  %317 = vmatpush.msra.mxu0 %v72
  %318 = vmatpush.msra.mxu0 %v70
  %319 = vmatpush.msra.mxu0 %v68
  %320 = vmatpush.msra.mxu0 %v66
  %321 = vmatpush.msra.mxu0 %v64
  %322 = vmatpush.msra.mxu0 %v62
  %323 = vmatpush.msra.mxu0 %v60
  %324 = vmatpush.msra.mxu0 %v58
  %325 = vmatpush.msra.mxu0 %v56
  %326 = vmatpush.msra.mxu0 %v54
  %327 = vmatpush.msra.mxu0 %v52
  %328 = vmatpush.msra.mxu0 %v50
  %329 = vmatpush.msra.mxu0 %v48
  %330 = vmatpush.msra.mxu0 %v46
  %331 = vmatpush.msra.mxu0 %v44
  %332 = vmatmul.f32.gmra.mxu0 %v189
  %v333 = vpop.f32.mrf.mxu0
  %v334 = vadd.f32 %v314, %v333
  %335 = vdwg.mxu0
  %336 = vmatpush.msra.mxu0 %v106
  %337 = vmatpush.msra.mxu0 %v104
  %338 = vmatpush.msra.mxu0 %v102
  %339 = vmatpush.msra.mxu0 %v100
  %340 = vmatpush.msra.mxu0 %v98
  %341 = vmatpush.msra.mxu0 %v96
  %342 = vmatpush.msra.mxu0 %v94
  %343 = vmatpush.msra.mxu0 %v92
  %344 = vmatpush.msra.mxu0 %v90
  %345 = vmatpush.msra.mxu0 %v88
  %346 = vmatpush.msra.mxu0 %v86
  %347 = vmatpush.msra.mxu0 %v84
  %348 = vmatpush.msra.mxu0 %v82
  %349 = vmatpush.msra.mxu0 %v80
  %350 = vmatpush.msra.mxu0 %v78
  %351 = vmatpush.msra.mxu0 %v76
  %352 = vmatmul.f32.gmra.mxu0 %v202
  %v353 = vpop.f32.mrf.mxu0
  %v354 = vadd.f32 %v334, %v353
  %355 = vdwg.mxu0
  %356 = vmatpush.msra.mxu0 %v138
  %357 = vmatpush.msra.mxu0 %v136
  %358 = vmatpush.msra.mxu0 %v134
  %359 = vmatpush.msra.mxu0 %v132
  %360 = vmatpush.msra.mxu0 %v130
  %361 = vmatpush.msra.mxu0 %v128
  %362 = vmatpush.msra.mxu0 %v126
  %363 = vmatpush.msra.mxu0 %v124
  %364 = vmatpush.msra.mxu0 %v122
  %365 = vmatpush.msra.mxu0 %v120
  %366 = vmatpush.msra.mxu0 %v118
  %367 = vmatpush.msra.mxu0 %v116
  %368 = vmatpush.msra.mxu0 %v114
  %369 = vmatpush.msra.mxu0 %v112
  %370 = vmatpush.msra.mxu0 %v110
  %371 = vmatpush.msra.mxu0 %v108
  %372 = vmatmul.f32.gmra.mxu0 %v215
  %v373 = vpop.f32.mrf.mxu0
  %v374 = vadd.f32 %v354, %v373
  %375 = vdwg.mxu0
  %v376 = vxor.u32 %v294, 2147483648
  %v377 = vxor.u32 %v374, 2147483648
  %v378 = vmul.f32 %v376, 1.442695
  %v379 = vpow.pop %v378
  %v380 = vmul.f32 %v377, 1.442695
  %v381 = vpow.pop %v380
  %v382 = vadd.f32 %v379, 1.0
  %v383 = vadd.f32 %v381, 1.0
  %v384 = vrcp.pop %v382
  %v385 = vmul.f32 %v382, %v384
  %v386 = vsub.f32 1.0, %v385
  %v387 = vmul.f32 %v384, %v386
  %v388 = vadd.f32 %v384, %v387
  %vm389 = vweird.f32 %v382
  %vm390 = vweird.f32 %v384
  %vm391 = vmor %vm389, %vm390
  %v392 = vsel %vm391, %v384, %v388
  %v393 = vand.u32 2147483647, %v382
  %vm394 = vcmp.eq.f32.partialorder %v393, 8.507059e+37
  %v395 = vand.u32 %v382, 2147483648
  %v396 = vor.u32 1.1754944e-38, %v395
  %v397 = vsel %vm394, %v396, %v392
  %v398 = vmul.f32 1.0, %v397
  %v399 = vrcp.pop %v383
  %v400 = vmul.f32 %v383, %v399
  %v401 = vsub.f32 1.0, %v400
  %v402 = vmul.f32 %v399, %v401
  %v403 = vadd.f32 %v399, %v402
  %vm404 = vweird.f32 %v383
  %vm405 = vweird.f32 %v399
  %vm406 = vmor %vm404, %vm405
  %v407 = vsel %vm406, %v399, %v403
  %v408 = vand.u32 2147483647, %v383
  %vm409 = vcmp.eq.f32.partialorder %v408, 8.507059e+37
  %v410 = vand.u32 %v383, 2147483648
  %v411 = vor.u32 1.1754944e-38, %v410
  %v412 = vsel %vm409, %v411, %v407
  %v413 = vmul.f32 1.0, %v412
  %v414 = vadd.f32 %v398, 1.0
  %v415 = vadd.f32 %v413, 1.0
  %v416 = vperm.slane %v414, 0
  %v417 = vperm.slane %v415, 0
  %v418 = vmul.f32 %v139, %v416
  %v419 = vmul.f32 %v140, %v417
  %v420 = vmul.f32 %v141, %v416
  %v421 = vmul.f32 %v142, %v417
  %v422 = vmul.f32 %v143, %v416
  %v423 = vmul.f32 %v144, %v417
  %v424 = vmul.f32 %v145, %v416
  %v425 = vmul.f32 %v146, %v417
  %v426 = vmul.f32 %v147, %v416
  %v427 = vmul.f32 %v148, %v417
  %v428 = vmul.f32 %v149, %v416
  %v429 = vmul.f32 %v150, %v417
  %v430 = vmul.f32 %v151, %v416
  %v431 = vmul.f32 %v152, %v417
  %v432 = vmul.f32 %v153, %v416
  %v433 = vmul.f32 %v154, %v417
  %434 = vst [vmem:[%s2] sm:$0xff] %v418
  %435 = vst [vmem:[%s2 + $0x8] sm:$0xff] %v419
  %436 = vst [vmem:[%s2 + $0x10] sm:$0xff] %v420
  %437 = vst [vmem:[%s2 + $0x18] sm:$0xff] %v421
  %438 = vst [vmem:[%s2 + $0x20] sm:$0xff] %v422
  %439 = vst [vmem:[%s2 + $0x28] sm:$0xff] %v423
  %440 = vst [vmem:[%s2 + $0x30] sm:$0xff] %v424
  %441 = vst [vmem:[%s2 + $0x38] sm:$0xff] %v425
  %442 = vst [vmem:[%s2 + $0x40] sm:$0xff] %v426
  %443 = vst [vmem:[%s2 + $0x48] sm:$0xff] %v427
  %444 = vst [vmem:[%s2 + $0x50] sm:$0xff] %v428
  %445 = vst [vmem:[%s2 + $0x58] sm:$0xff] %v429
  %446 = vst [vmem:[%s2 + $0x60] sm:$0xff] %v430
  %447 = vst [vmem:[%s2 + $0x68] sm:$0xff] %v431
  %448 = vst [vmem:[%s2 + $0x70] sm:$0xff] %v432
  %449 = vst [vmem:[%s2 + $0x78] sm:$0xff] %v433
  %s450 = scalar_lea.vmem %s0, 128
  %v451 = vld [vmem:[%s450] sm:$0xff]
  %v452 = vld [vmem:[%s450 + $0x8] sm:$0xff]
  %v453 = vld [vmem:[%s450 + $0x10] sm:$0xff]
  %v454 = vld [vmem:[%s450 + $0x18] sm:$0xff]
  %v455 = vld [vmem:[%s450 + $0x20] sm:$0xff]
  %v456 = vld [vmem:[%s450 + $0x28] sm:$0xff]
  %v457 = vld [vmem:[%s450 + $0x30] sm:$0xff]
  %v458 = vld [vmem:[%s450 + $0x38] sm:$0xff]
  %v459 = vld [vmem:[%s450 + $0x40] sm:$0xff]
  %v460 = vld [vmem:[%s450 + $0x48] sm:$0xff]
  %v461 = vld [vmem:[%s450 + $0x50] sm:$0xff]
  %v462 = vld [vmem:[%s450 + $0x58] sm:$0xff]
  %v463 = vld [vmem:[%s450 + $0x60] sm:$0xff]
  %v464 = vld [vmem:[%s450 + $0x68] sm:$0xff]
  %v465 = vld [vmem:[%s450 + $0x70] sm:$0xff]
  %v466 = vld [vmem:[%s450 + $0x78] sm:$0xff]
  %v467 = vadd.f32 %v451, %v453
  %v468 = vadd.f32 %v467, %v455
  %v469 = vadd.f32 %v468, %v457
  %v470 = vadd.f32 %v469, %v459
  %v471 = vadd.f32 %v470, %v461
  %v472 = vadd.f32 %v471, %v463
  %v473 = vadd.f32 %v472, %v465
  %v474 = vrot.slane %v473, 4
  %v475 = vadd.f32 %v473, %v474
  %v476 = vrot.slane %v475, 2
  %v477 = vadd.f32 %v475, %v476
  %v478 = vrot.slane %v477, 1
  %v479 = vadd.f32 %v477, %v478
  %v480 = vadd.f32 %v452, %v454
  %v481 = vadd.f32 %v480, %v456
  %v482 = vadd.f32 %v481, %v458
  %v483 = vadd.f32 %v482, %v460
  %v484 = vadd.f32 %v483, %v462
  %v485 = vadd.f32 %v484, %v464
  %v486 = vadd.f32 %v485, %v466
  %v487 = vrot.slane %v486, 4
  %v488 = vadd.f32 %v486, %v487
  %v489 = vrot.slane %v488, 2
  %v490 = vadd.f32 %v488, %v489
  %v491 = vrot.slane %v490, 1
  %v492 = vadd.f32 %v490, %v491
  %v493 = vmul.f32 %v479, %v187
  %v494 = vmul.f32 %v492, %v187
  %v495 = vmax.f32 %v451, %v455
  %v496 = vmax.f32 %v453, %v457
  %v497 = vmax.f32 %v495, %v459
  %v498 = vmax.f32 %v496, %v461
  %v499 = vmax.f32 %v497, %v463
  %v500 = vmax.f32 %v498, %v465
  %v501 = vmax.f32 %v499, %v500
  %v502 = vrot.slane %v501, 4
  %v503 = vmax.f32 %v501, %v502
  %v504 = vrot.slane %v503, 2
  %v505 = vmax.f32 %v503, %v504
  %v506 = vrot.slane %v505, 1
  %v507 = vmax.f32 %v505, %v506
  %v508 = vmax.f32 %v452, %v456
  %v509 = vmax.f32 %v454, %v458
  %v510 = vmax.f32 %v508, %v460
  %v511 = vmax.f32 %v509, %v462
  %v512 = vmax.f32 %v510, %v464
  %v513 = vmax.f32 %v511, %v466
  %v514 = vmax.f32 %v512, %v513
  %v515 = vrot.slane %v514, 4
  %v516 = vmax.f32 %v514, %v515
  %v517 = vrot.slane %v516, 2
  %v518 = vmax.f32 %v516, %v517
  %v519 = vrot.slane %v518, 1
  %v520 = vmax.f32 %v518, %v519
  %521 = vmatpush.msra.mxu0 %v41
  %522 = vmatpush.msra.mxu0 %v39
  %523 = vmatpush.msra.mxu0 %v37
  %524 = vmatpush.msra.mxu0 %v35
  %525 = vmatpush.msra.mxu0 %v33
  %526 = vmatpush.msra.mxu0 %v31
  %527 = vmatpush.msra.mxu0 %v29
  %528 = vmatpush.msra.mxu0 %v27
  %529 = vmatpush.msra.mxu0 %v25
  %530 = vmatpush.msra.mxu0 %v23
  %531 = vmatpush.msra.mxu0 %v21
  %532 = vmatpush.msra.mxu0 %v19
  %533 = vmatpush.msra.mxu0 %v17
  %534 = vmatpush.msra.mxu0 %v15
  %535 = vmatpush.msra.mxu0 %v13
  %536 = vmatpush.msra.mxu0 %v11
  %537 = vmatmul.f32.gmra.mxu0 %v493
  %v538 = vpop.f32.mrf.mxu0
  %v539 = vadd.f32 0.0, %v538
  %540 = vdwg.mxu0
  %541 = vmatpush.msra.mxu0 %v73
  %542 = vmatpush.msra.mxu0 %v71
  %543 = vmatpush.msra.mxu0 %v69
  %544 = vmatpush.msra.mxu0 %v67
  %545 = vmatpush.msra.mxu0 %v65
  %546 = vmatpush.msra.mxu0 %v63
  %547 = vmatpush.msra.mxu0 %v61
  %548 = vmatpush.msra.mxu0 %v59
  %549 = vmatpush.msra.mxu0 %v57
  %550 = vmatpush.msra.mxu0 %v55
  %551 = vmatpush.msra.mxu0 %v53
  %552 = vmatpush.msra.mxu0 %v51
  %553 = vmatpush.msra.mxu0 %v49
  %554 = vmatpush.msra.mxu0 %v47
  %555 = vmatpush.msra.mxu0 %v45
  %556 = vmatpush.msra.mxu0 %v43
  %557 = vmatmul.f32.gmra.mxu0 %v494
  %v558 = vpop.f32.mrf.mxu0
  %v559 = vadd.f32 %v539, %v558
  %560 = vdwg.mxu0
  %561 = vmatpush.msra.mxu0 %v105
  %562 = vmatpush.msra.mxu0 %v103
  %563 = vmatpush.msra.mxu0 %v101
  %564 = vmatpush.msra.mxu0 %v99
  %565 = vmatpush.msra.mxu0 %v97
  %566 = vmatpush.msra.mxu0 %v95
  %567 = vmatpush.msra.mxu0 %v93
  %568 = vmatpush.msra.mxu0 %v91
  %569 = vmatpush.msra.mxu0 %v89
  %570 = vmatpush.msra.mxu0 %v87
  %571 = vmatpush.msra.mxu0 %v85
  %572 = vmatpush.msra.mxu0 %v83
  %573 = vmatpush.msra.mxu0 %v81
  %574 = vmatpush.msra.mxu0 %v79
  %575 = vmatpush.msra.mxu0 %v77
  %576 = vmatpush.msra.mxu0 %v75
  %577 = vmatmul.f32.gmra.mxu0 %v507
  %v578 = vpop.f32.mrf.mxu0
  %v579 = vadd.f32 %v559, %v578
  %580 = vdwg.mxu0
  %581 = vmatpush.msra.mxu0 %v137
  %582 = vmatpush.msra.mxu0 %v135
  %583 = vmatpush.msra.mxu0 %v133
  %584 = vmatpush.msra.mxu0 %v131
  %585 = vmatpush.msra.mxu0 %v129
  %586 = vmatpush.msra.mxu0 %v127
  %587 = vmatpush.msra.mxu0 %v125
  %588 = vmatpush.msra.mxu0 %v123
  %589 = vmatpush.msra.mxu0 %v121
  %590 = vmatpush.msra.mxu0 %v119
  %591 = vmatpush.msra.mxu0 %v117
  %592 = vmatpush.msra.mxu0 %v115
  %593 = vmatpush.msra.mxu0 %v113
  %594 = vmatpush.msra.mxu0 %v111
  %595 = vmatpush.msra.mxu0 %v109
  %596 = vmatpush.msra.mxu0 %v107
  %597 = vmatmul.f32.gmra.mxu0 %v520
  %v598 = vpop.f32.mrf.mxu0
  %v599 = vadd.f32 %v579, %v598
  %600 = vdwg.mxu0
  %601 = vmatpush.msra.mxu0 %v42
  %602 = vmatpush.msra.mxu0 %v40
  %603 = vmatpush.msra.mxu0 %v38
  %604 = vmatpush.msra.mxu0 %v36
  %605 = vmatpush.msra.mxu0 %v34
  %606 = vmatpush.msra.mxu0 %v32
  %607 = vmatpush.msra.mxu0 %v30
  %608 = vmatpush.msra.mxu0 %v28
  %609 = vmatpush.msra.mxu0 %v26
  %610 = vmatpush.msra.mxu0 %v24
  %611 = vmatpush.msra.mxu0 %v22
  %612 = vmatpush.msra.mxu0 %v20
  %613 = vmatpush.msra.mxu0 %v18
  %614 = vmatpush.msra.mxu0 %v16
  %615 = vmatpush.msra.mxu0 %v14
  %616 = vmatpush.msra.mxu0 %v12
  %617 = vmatmul.f32.gmra.mxu0 %v493
  %v618 = vpop.f32.mrf.mxu0
  %v619 = vadd.f32 0.0, %v618
  %620 = vdwg.mxu0
  %621 = vmatpush.msra.mxu0 %v74
  %622 = vmatpush.msra.mxu0 %v72
  %623 = vmatpush.msra.mxu0 %v70
  %624 = vmatpush.msra.mxu0 %v68
  %625 = vmatpush.msra.mxu0 %v66
  %626 = vmatpush.msra.mxu0 %v64
  %627 = vmatpush.msra.mxu0 %v62
  %628 = vmatpush.msra.mxu0 %v60
  %629 = vmatpush.msra.mxu0 %v58
  %630 = vmatpush.msra.mxu0 %v56
  %631 = vmatpush.msra.mxu0 %v54
  %632 = vmatpush.msra.mxu0 %v52
  %633 = vmatpush.msra.mxu0 %v50
  %634 = vmatpush.msra.mxu0 %v48
  %635 = vmatpush.msra.mxu0 %v46
  %636 = vmatpush.msra.mxu0 %v44
  %637 = vmatmul.f32.gmra.mxu0 %v494
  %v638 = vpop.f32.mrf.mxu0
  %v639 = vadd.f32 %v619, %v638
  %640 = vdwg.mxu0
  %641 = vmatpush.msra.mxu0 %v106
  %642 = vmatpush.msra.mxu0 %v104
  %643 = vmatpush.msra.mxu0 %v102
  %644 = vmatpush.msra.mxu0 %v100
  %645 = vmatpush.msra.mxu0 %v98
  %646 = vmatpush.msra.mxu0 %v96
  %647 = vmatpush.msra.mxu0 %v94
  %648 = vmatpush.msra.mxu0 %v92
  %649 = vmatpush.msra.mxu0 %v90
  %650 = vmatpush.msra.mxu0 %v88
  %651 = vmatpush.msra.mxu0 %v86
  %652 = vmatpush.msra.mxu0 %v84
  %653 = vmatpush.msra.mxu0 %v82
  %654 = vmatpush.msra.mxu0 %v80
  %655 = vmatpush.msra.mxu0 %v78
  %656 = vmatpush.msra.mxu0 %v76
  %657 = vmatmul.f32.gmra.mxu0 %v507
  %v658 = vpop.f32.mrf.mxu0
  %v659 = vadd.f32 %v639, %v658
  %660 = vdwg.mxu0
  %661 = vmatpush.msra.mxu0 %v138
  %662 = vmatpush.msra.mxu0 %v136
  %663 = vmatpush.msra.mxu0 %v134
  %664 = vmatpush.msra.mxu0 %v132
  %665 = vmatpush.msra.mxu0 %v130
  %666 = vmatpush.msra.mxu0 %v128
  %667 = vmatpush.msra.mxu0 %v126
  %668 = vmatpush.msra.mxu0 %v124
  %669 = vmatpush.msra.mxu0 %v122
  %670 = vmatpush.msra.mxu0 %v120
  %671 = vmatpush.msra.mxu0 %v118
  %672 = vmatpush.msra.mxu0 %v116
  %673 = vmatpush.msra.mxu0 %v114
  %674 = vmatpush.msra.mxu0 %v112
  %675 = vmatpush.msra.mxu0 %v110
  %676 = vmatpush.msra.mxu0 %v108
  %677 = vmatmul.f32.gmra.mxu0 %v520
  %v678 = vpop.f32.mrf.mxu0
  %v679 = vadd.f32 %v659, %v678
  %680 = vdwg.mxu0
  %v681 = vxor.u32 %v599, 2147483648
  %v682 = vxor.u32 %v679, 2147483648
  %v683 = vmul.f32 %v681, 1.442695
  %v684 = vpow.pop %v683
  %v685 = vmul.f32 %v682, 1.442695
  %v686 = vpow.pop %v685
  %v687 = vadd.f32 %v684, 1.0
  %v688 = vadd.f32 %v686, 1.0
  %v689 = vrcp.pop %v687
  %v690 = vmul.f32 %v687, %v689
  %v691 = vsub.f32 1.0, %v690
  %v692 = vmul.f32 %v689, %v691
  %v693 = vadd.f32 %v689, %v692
  %vm694 = vweird.f32 %v687
  %vm695 = vweird.f32 %v689
  %vm696 = vmor %vm694, %vm695
  %v697 = vsel %vm696, %v689, %v693
  %v698 = vand.u32 2147483647, %v687
  %vm699 = vcmp.eq.f32.partialorder %v698, 8.507059e+37
  %v700 = vand.u32 %v687, 2147483648
  %v701 = vor.u32 1.1754944e-38, %v700
  %v702 = vsel %vm699, %v701, %v697
  %v703 = vmul.f32 1.0, %v702
  %v704 = vrcp.pop %v688
  %v705 = vmul.f32 %v688, %v704
  %v706 = vsub.f32 1.0, %v705
  %v707 = vmul.f32 %v704, %v706
  %v708 = vadd.f32 %v704, %v707
  %vm709 = vweird.f32 %v688
  %vm710 = vweird.f32 %v704
  %vm711 = vmor %vm709, %vm710
  %v712 = vsel %vm711, %v704, %v708
  %v713 = vand.u32 2147483647, %v688
  %vm714 = vcmp.eq.f32.partialorder %v713, 8.507059e+37
  %v715 = vand.u32 %v688, 2147483648
  %v716 = vor.u32 1.1754944e-38, %v715
  %v717 = vsel %vm714, %v716, %v712
  %v718 = vmul.f32 1.0, %v717
  %v719 = vadd.f32 %v703, 1.0
  %v720 = vadd.f32 %v718, 1.0
  %v721 = vperm.slane %v719, 0
  %v722 = vperm.slane %v720, 0
  %v723 = vmul.f32 %v451, %v721
  %v724 = vmul.f32 %v452, %v722
  %v725 = vmul.f32 %v453, %v721
  %v726 = vmul.f32 %v454, %v722
  %v727 = vmul.f32 %v455, %v721
  %v728 = vmul.f32 %v456, %v722
  %v729 = vmul.f32 %v457, %v721
  %v730 = vmul.f32 %v458, %v722
  %v731 = vmul.f32 %v459, %v721
  %v732 = vmul.f32 %v460, %v722
  %v733 = vmul.f32 %v461, %v721
  %v734 = vmul.f32 %v462, %v722
  %v735 = vmul.f32 %v463, %v721
  %v736 = vmul.f32 %v464, %v722
  %v737 = vmul.f32 %v465, %v721
  %v738 = vmul.f32 %v466, %v722
  %s739 = scalar_lea.vmem %s2, 128
  %740 = vst [vmem:[%s739] sm:$0xff] %v723
  %741 = vst [vmem:[%s739 + $0x8] sm:$0xff] %v724
  %742 = vst [vmem:[%s739 + $0x10] sm:$0xff] %v725
  %743 = vst [vmem:[%s739 + $0x18] sm:$0xff] %v726
  %744 = vst [vmem:[%s739 + $0x20] sm:$0xff] %v727
  %745 = vst [vmem:[%s739 + $0x28] sm:$0xff] %v728
  %746 = vst [vmem:[%s739 + $0x30] sm:$0xff] %v729
  %747 = vst [vmem:[%s739 + $0x38] sm:$0xff] %v730
  %748 = vst [vmem:[%s739 + $0x40] sm:$0xff] %v731
  %749 = vst [vmem:[%s739 + $0x48] sm:$0xff] %v732
  %750 = vst [vmem:[%s739 + $0x50] sm:$0xff] %v733
  %751 = vst [vmem:[%s739 + $0x58] sm:$0xff] %v734
  %752 = vst [vmem:[%s739 + $0x60] sm:$0xff] %v735
  %753 = vst [vmem:[%s739 + $0x68] sm:$0xff] %v736
  %754 = vst [vmem:[%s739 + $0x70] sm:$0xff] %v737
  %755 = vst [vmem:[%s739 + $0x78] sm:$0xff] %v738
  // Predicated region
  $region10: #{sa_forward.1} parent=0 // pred_check
    _
  $region11: #{sa_forward.1} parent=0 // pred_check_branch
    %757 = sbr.rel (0) target = $region13
  $region12: #{sa_forward.1} parent=0 // pred_region
    _
  $region13: #{sa_forward.1} parent=0 // pred_fallthru
    _
  // Predicated region
  $region14: #{sa_forward.1} parent=0 // pred_check
    _
  $region15: #{sa_forward.1} parent=0 // pred_check_branch
    %759 = sbr.rel (0) target = $region17
  $region16: #{sa_forward.1} parent=0 // pred_region
    _
  $region17: #{sa_forward.1} parent=0 // pred_fallthru
    _

</llo_original>
